<compile_context>
chip_gen: v5e
topology: v5e:2x2
jax: 0.10.0
libtpu: 0.0.40
codegen_flags: <defaults>
</compile_context>

<pallas_src>
import functools

import jax
import jax.numpy as jnp
from jax import lax
from jax.experimental import pallas as pl
from jax.experimental.pallas import tpu as pltpu

LANE = 128       # lane width
MIN_BLK_R = 512  # below this an exact-divisor block is not worth it (per-step overhead)


def _sublane_rows(dtype):
    """Sublane alignment for the second-to-last dim: 8 (f32), 16 (bf16), 32 (int8/fp8)."""
    return 8 * max(1, 4 // jnp.dtype(dtype).itemsize)


def _device_caps():
    """(max block rows, vmem_limit_bytes) per TPU generation; conservative fallback."""
    kind = ""
    try:
        kind = jax.devices()[0].device_kind.lower()
    except Exception:
        pass
    if "v6" in kind:                    # v6e: 128 MiB physical VMEM, huge headroom
        return 8192, 64 * 1024 * 1024
    if "v7" in kind or "7x" in kind:    # v7x: 64 MiB physical VMEM per TensorCore
        return 8192, 40 * 1024 * 1024
    # v5e (16 MiB default scoped VMEM) and anything unknown: 2 MiB blocks ->
    # 8 MiB of double-buffered inputs, safely inside every default budget.
    return 4096, None


def _strip_rows_for(block_rows):
    """Largest of (32, 16, 8) rows dividing block_rows -> strip / accumulator height."""
    for s in (32, 16, 8):
        if block_rows % s == 0:
            return s
    return 8  # unreachable: block_rows is always a multiple of 8


def _choose_block_rows(rows, sub, max_blk):
    """rows is a positive multiple of `sub`.  Returns (block_rows, steps).

    The kernel covers steps*block_rows rows; any leftover rows are reduced in plain
    (fused) JAX.  Preference order: exact divisor of `rows`, blocks that are a
    multiple of 64 rows (clean strip decomposition), and >= 2 grid steps when there
    is enough work (megacore balance on v7x)."""
    cap = min(max_blk, rows)
    if cap == rows and rows >= 2 * MIN_BLK_R:
        cap = max(sub, ((rows // 2) // sub) * sub)      # prefer >= 2 grid steps
    # Pass 1: divisors that are multiples of 64 rows.
    for cand in range((cap // 64) * 64, 63, -64):
        if rows % cand == 0 and (cand >= MIN_BLK_R or cand == rows):
            return cand, rows // cand
    # Pass 2: any multiple-of-`sub` divisor.
    for cand in range(cap, sub - 1, -sub):
        if rows % cand == 0 and (cand >= MIN_BLK_R or cand == rows):
            return cand, rows // cand
    # No good exact divisor: full-size blocks; the small leftover goes to plain JAX.
    return cap, rows // cap


def _charbonnier_kernel(x_ref, y_ref, out_ref, *, eps, strip_rows, nstrips):
    """Sum of sqrt((x-y)^2 + eps^2) over one (nstrips*strip_rows, 128) block,
    folded into a (strip_rows, 128) lane-wise partial sum (VPU adds only, no XLU)."""
    eps2 = jnp.float32(eps) * jnp.float32(eps)

    def strip_body(r, acc):
        xs = x_ref[pl.ds(r, strip_rows), :].astype(jnp.float32)
        ys = y_ref[pl.ds(r, strip_rows), :].astype(jnp.float32)
        d = xs - ys
        return acc + jnp.sqrt(d * d + eps2)

    acc = jnp.zeros((strip_rows, LANE), jnp.float32)
    if nstrips == 1:
        acc = strip_body(0, acc)
    else:
        acc = lax.fori_loop(
            0, nstrips,
            lambda k, a: strip_body(pl.multiple_of(k * strip_rows, strip_rows), a),
            acc,
            unroll=min(4, nstrips))
    out_ref[...] = acc.reshape(1, strip_rows, LANE)


def charbonnier_loss(x, y, eps=1e-3):
    assert x.shape == y.shape, (x.shape, y.shape)
    n_elems = x.size
    eps = float(eps)
    eps2 = jnp.float32(eps) * jnp.float32(eps)

    # Wide dtypes: stream as f32 (TPU-native); narrow dtypes stream at native width
    # and are upcast inside the kernel.
    if jnp.dtype(x.dtype).itemsize > 4:
        x = x.astype(jnp.float32)
    if jnp.dtype(y.dtype).itemsize > 4:
        y = y.astype(jnp.float32)

    xf = jnp.ravel(x)
    yf = jnp.ravel(y)

    sub = max(_sublane_rows(x.dtype), _sublane_rows(y.dtype))
    max_blk, vmem_limit = _device_caps()

    rows = (n_elems // (sub * LANE)) * sub   # rows eligible for full-tile kernel work
    total = jnp.float32(0.0)
    main_rows = 0

    if rows > 0:
        block_rows, steps = _choose_block_rows(rows, sub, max_blk)
        main_rows = block_rows * steps

        # Lane-dense 2-D view of the flat data.  When n_elems is a multiple of 128
        # (any realistic image tensor) this reshape is free; the grid simply never
        # touches rows beyond `main_rows`, so no slicing/padding copy is needed.
        if n_elems % LANE == 0:
            x2 = xf.reshape(-1, LANE)
            y2 = yf.reshape(-1, LANE)
        else:
            nb = (n_elems // LANE) * LANE
            # TODO(synk): a masked final block (or in-kernel 1-D layout) would avoid
            # this bulk slice copy for element counts that aren't a multiple of 128.
            x2 = xf[:nb].reshape(-1, LANE)
            y2 = yf[:nb].reshape(-1, LANE)

        strip_rows = _strip_rows_for(block_rows)
        nstrips = block_rows // strip_rows
        kernel = functools.partial(_charbonnier_kernel, eps=eps,
                                   strip_rows=strip_rows, nstrips=nstrips)

        partials = pl.pallas_call(
            kernel,
            out_shape=jax.ShapeDtypeStruct((steps, strip_rows, LANE), jnp.float32),
            grid_spec=pltpu.PrefetchScalarGridSpec(
                num_scalar_prefetch=0,
                grid=(steps,),
                in_specs=[
                    pl.BlockSpec((block_rows, LANE), lambda i: (i, 0)),
                    pl.BlockSpec((block_rows, LANE), lambda i: (i, 0)),
                ],
                # Each grid step owns its own partial-sum slot -> the axis is truly
                # parallel (megacore shards it on v7x); XLA sums the tiny result.
                out_specs=pl.BlockSpec((1, strip_rows, LANE), lambda i: (i, 0, 0)),
            ),
            compiler_params=pltpu.CompilerParams(
                dimension_semantics=("parallel",),
                vmem_limit_bytes=vmem_limit,
            ),
        )(x2, y2)
        total = total + jnp.sum(partials)

    # Leftover elements (sub-tile tail and/or rows the block grid did not cover):
    # plain JAX; XLA fuses slice + sub + sqrt + reduce, reading them exactly once.
    main_elems = main_rows * LANE
    if main_elems < n_elems:
        xt = xf[main_elems:].astype(jnp.float32)
        yt = yf[main_elems:].astype(jnp.float32)
        dt = xt - yt
        total = total + jnp.sum(jnp.sqrt(dt * dt + eps2))

    return total / jnp.float32(n_elems)


if __name__ == "__main__":
    key = jax.random.PRNGKey(0)
    kx, ky = jax.random.split(key)
    # NCHW inputs, small shapes (batch=2, channels=4, spatial=16).
    x = jax.random.normal(kx, (2, 4, 16, 16), dtype=jnp.float32)
    y = jax.random.normal(ky, (2, 4, 16, 16), dtype=jnp.float32)

    loss = charbonnier_loss(x, y, eps=1e-3)
    loss = jax.block_until_ready(loss)

    # Reference check (plain JAX), matching the PyTorch module's semantics.
    diff = x - y
    ref = jnp.mean(jnp.sqrt(diff * diff + 1e-3 * 1e-3))
    assert jnp.allclose(loss, ref, rtol=1e-5, atol=1e-6), (loss, ref)

    print("KERNEL_OK")
</pallas_src>

<mosaic_0001>
module attributes {stable_mosaic.version = 11 : i64} {
  func.func @_charbonnier_kernel(%arg0: i32, %arg1: memref<16x128xf32, #tpu.memory_space<vmem>>, %arg2: memref<16x128xf32, #tpu.memory_space<vmem>>, %arg3: memref<1x16x128xf32, #tpu.memory_space<vmem>>) attributes {dimension_semantics = [#tpu.dimension_semantics<parallel>], iteration_bounds = array<i64: 1>, scalar_prefetch = 0 : i64, scratch_operands = 0 : i64, tpu.core_type = #tpu.core_type<tc>, window_params = [{transform_indices = @transform_0, window_bounds = array<i64: 16, 128>}, {transform_indices = @transform_1, window_bounds = array<i64: 16, 128>}, {transform_indices = @transform_2, window_bounds = array<i64: 1, 16, 128>}]} {
    %cst = arith.constant 1.000000e-03 : f32
    %cst_0 = arith.constant 1.000000e-03 : f32
    %0 = arith.mulf %cst, %cst_0 : f32
    %cst_1 = arith.constant 0.000000e+00 : f32
    %1 = vector.broadcast %cst_1 : f32 to vector<16x128xf32>
    %c0 = arith.constant 0 : index
    %c0_2 = arith.constant 0 : index
    %2 = vector.load %arg1[%c0, %c0_2] : memref<16x128xf32, #tpu.memory_space<vmem>>, vector<16x128xf32>
    %c0_3 = arith.constant 0 : index
    %c0_4 = arith.constant 0 : index
    %3 = vector.load %arg2[%c0_3, %c0_4] : memref<16x128xf32, #tpu.memory_space<vmem>>, vector<16x128xf32>
    %4 = arith.subf %2, %3 : vector<16x128xf32>
    %5 = arith.mulf %4, %4 : vector<16x128xf32>
    %6 = vector.broadcast %0 : f32 to vector<16x128xf32>
    %7 = arith.addf %5, %6 : vector<16x128xf32>
    %8 = math.sqrt %7 : vector<16x128xf32>
    %9 = arith.addf %1, %8 : vector<16x128xf32>
    %10 = vector.shape_cast %9 : vector<16x128xf32> to vector<1x16x128xf32>
    %c0_5 = arith.constant 0 : index
    %c0_6 = arith.constant 0 : index
    %c0_7 = arith.constant 0 : index
    %11 = vector.load %arg3[%c0_5, %c0_6, %c0_7] : memref<1x16x128xf32, #tpu.memory_space<vmem>>, vector<1x16x128xf32>
    tpu.vector_store %arg3[%c0_5, %c0_6, %c0_7], %10 {strides = array<i32>} : memref<1x16x128xf32, #tpu.memory_space<vmem>>, vector<1x16x128xf32>,
    return
  }
  func.func @transform_0(%arg0: i32) -> (i32, i32) {
    %c0_i32 = arith.constant 0 : i32
    %c0_i32_0 = arith.constant 0 : i32
    return %arg0, %c0_i32 : i32, i32
  }
  func.func @transform_1(%arg0: i32) -> (i32, i32) {
    %c0_i32 = arith.constant 0 : i32
    %c0_i32_0 = arith.constant 0 : i32
    return %arg0, %c0_i32 : i32, i32
  }
  func.func @transform_2(%arg0: i32) -> (i32, i32, i32) {
    %c0_i32 = arith.constant 0 : i32
    %c0_i32_0 = arith.constant 0 : i32
    %c0_i32_1 = arith.constant 0 : i32
    return %arg0, %c0_i32, %c0_i32_0 : i32, i32, i32
  }
}

</mosaic_0001>

<llo_original>
// kernel: tpu_custom_call.1
$region0: #{tpu_custom_call.1}
  #allocation0 [shape = 'u32[]', space=smem, size = 0x4, offset = 0x4, fixed_abs, tag = 'smem constant byte address 0x4 - core index']
  #allocation1 [shape = 'u32[72,128]{1,0:T(1,128)}', space=vmem, size = 0x9000, scoped, tag = 'internal scratch']
  %s0 = inlined_call_operand.hbm [shape: f32[16,128], index: 0, kind: input, shape index: {}]
  %s1 = inlined_call_operand.hbm [shape: f32[16,128], index: 1, kind: input, shape index: {}]
  %s2 = inlined_call_operand.hbm [shape: f32[1,16,128], index: 2, kind: output, shape index: {}]
  %s3 = sld [smem:[#allocation0]]
  $region26: #{tpu_custom_call.1} parent=0
    _
  %s5 = ssub.s32 1, %s3
  %s6 = scalar_select 0, %s5, %s3
  $region1: #{tpu_custom_call.1} parent=0
    #allocation2 [shape = 'u8[8192]{0}', space=vmem, size = 0x2000, scoped, tag = 'input window, operand 0, single buffered']
    #allocation3 [shape = 's32[1]{0}', space=sflag, size = 0x4, scoped, tag = 'scoped memory for tpu_custom_call.1']
    #allocation4 [shape = 's32[1]{0}', space=sflag, size = 0x4, scoped, tag = 'scoped memory for tpu_custom_call.1']
    #allocation5 [shape = 'u8[8192]{0}', space=vmem, size = 0x2000, scoped, tag = 'input window, operand 1, single buffered']
    #allocation6 [shape = 's32[1]{0}', space=sflag, size = 0x4, scoped, tag = 'scoped memory for tpu_custom_call.1']
    #allocation7 [shape = 'u8[8192]{0}', space=vmem, size = 0x2000, scoped, tag = 'output window, operand 0, single buffered']
    %7 = vsyncpa [#allocation3], 0
    %8 = vsyncpa [#allocation6], 0
    %9 = vsyncpa [#allocation4], 0
    // Predicated region
    $region2: #{tpu_custom_call.1} parent=1 // pred_check
      _
    $region3: #{tpu_custom_call.1} parent=1 // pred_check_branch
      %11 = sbr.rel (0) target = $region5
    $region4: #{tpu_custom_call.1} parent=1 // pred_region
      %13 = vsyncadd [#allocation3], 0
      %s14 = sshll.u32 %s0, 4
      %s15 = int_to_ptr.hbm [resolvable:$true] %s14
      %s16 = sshll.u32 [#allocation2], 4
      %s17 = int_to_ptr.vmem [resolvable:$true] %s16
      %22 = dma.hbm_to_vmem [thread:$0]  %s15, 256, %s17, [#allocation3], 128, 128, 8
    $region5: #{tpu_custom_call.1} parent=1 // pred_fallthru
      _
    // Predicated region
    $region6: #{tpu_custom_call.1} parent=1 // pred_check
      _
    $region7: #{tpu_custom_call.1} parent=1 // pred_check_branch
      %24 = sbr.rel (0) target = $region9
    $region8: #{tpu_custom_call.1} parent=1 // pred_region
      %26 = vsyncadd [#allocation6], 0
      %s27 = sshll.u32 %s1, 4
      %s28 = int_to_ptr.hbm [resolvable:$true] %s27
      %s29 = sshll.u32 [#allocation5], 4
      %s30 = int_to_ptr.vmem [resolvable:$true] %s29
      %35 = dma.hbm_to_vmem [thread:$0]  %s28, 256, %s30, [#allocation6], 128, 128, 8
    $region9: #{tpu_custom_call.1} parent=1 // pred_fallthru
      _
    // Predicated region
    $region10: #{tpu_custom_call.1} parent=1 // pred_check
      _
    $region11: #{tpu_custom_call.1} parent=1 // pred_check_branch
      %37 = sbr.rel (0) target = $region13
    $region12: #{tpu_custom_call.1} parent=1 // pred_region
      %39 = dma.done [#allocation3], 256
    $region13: #{tpu_custom_call.1} parent=1 // pred_fallthru
      _
    // Predicated region
    $region14: #{tpu_custom_call.1} parent=1 // pred_check
      _
    $region15: #{tpu_custom_call.1} parent=1 // pred_check_branch
      %41 = sbr.rel (0) target = $region17
    $region16: #{tpu_custom_call.1} parent=1 // pred_region
      %43 = dma.done [#allocation6], 256
    $region17: #{tpu_custom_call.1} parent=1 // pred_fallthru
      _
    %v44 = vld [vmem:[#allocation2] sm:$0xff]
    %v45 = vld [vmem:[#allocation2 + $0x8] sm:$0xff]
    %v46 = vld [vmem:[#allocation5] sm:$0xff]
    %v47 = vld [vmem:[#allocation5 + $0x8] sm:$0xff]
    %v48 = vsub.f32 %v44, %v46
    %v49 = vsub.f32 %v45, %v47
    %v50 = vmul.f32 %v48, %v48
    %v51 = vmul.f32 %v49, %v49
    %v52 = vadd.f32 %v50, 1.0000001e-06
    %v53 = vadd.f32 %v51, 1.0000001e-06
    %v54 = vrsqrt.pop %v52
    %v55 = vmul.f32 %v54, %v52
    %v56 = vmul.f32 %v55, %v54
    %v57 = vmul.f32 0.5, %v56
    %v58 = vsub.f32 1.5, %v57
    %v59 = vmul.f32 %v54, %v58
    %v60 = vmul.f32 %v52, %v59
    %vm61 = vcmp.eq.f32.partialorder %v52, inf
    %v62 = vsel %vm61, %v52, %v60
    %vm63 = vcmp.eq.f32.partialorder %v52, 0.0
    %v64 = vand.u32 %v52, 2147483648
    %v65 = vsel %vm63, %v64, %v62
    %v66 = vrsqrt.pop %v53
    %v67 = vmul.f32 %v66, %v53
    %v68 = vmul.f32 %v67, %v66
    %v69 = vmul.f32 0.5, %v68
    %v70 = vsub.f32 1.5, %v69
    %v71 = vmul.f32 %v66, %v70
    %v72 = vmul.f32 %v53, %v71
    %vm73 = vcmp.eq.f32.partialorder %v53, inf
    %v74 = vsel %vm73, %v53, %v72
    %vm75 = vcmp.eq.f32.partialorder %v53, 0.0
    %v76 = vand.u32 %v53, 2147483648
    %v77 = vsel %vm75, %v76, %v74
    %v78 = vadd.f32 %v65, 0.0
    %v79 = vadd.f32 %v77, 0.0
    %80 = vst [vmem:[#allocation7] sm:$0xff] %v78
    %81 = vst [vmem:[#allocation7 + $0x8] sm:$0xff] %v79
    // Predicated region
    $region18: #{tpu_custom_call.1} parent=1 // pred_check
      _
    $region19: #{tpu_custom_call.1} parent=1 // pred_check_branch
      %83 = sbr.rel (0) target = $region21
    $region20: #{tpu_custom_call.1} parent=1 // pred_region
      %85 = vsyncadd [#allocation4], 0
      %s86 = sshll.u32 [#allocation7], 4
      %s87 = int_to_ptr.vmem [resolvable:$true] %s86
      %s88 = sshll.u32 %s2, 4
      %s89 = int_to_ptr.hbm [resolvable:$true] %s88
      %94 = dma.vmem_to_hbm [thread:$0]  %s87, 256, %s89, [#allocation4], 128, 128, 8
    $region21: #{tpu_custom_call.1} parent=1 // pred_fallthru
      _
    // Predicated region
    $region22: #{tpu_custom_call.1} parent=1 // pred_check
      _
    $region23: #{tpu_custom_call.1} parent=1 // pred_check_branch
      %96 = sbr.rel (0) target = $region25
    $region24: #{tpu_custom_call.1} parent=1 // pred_region
      %98 = dma.done [#allocation4], 256
    $region25: #{tpu_custom_call.1} parent=1 // pred_fallthru
      _
    %99 = vsyncpa [#allocation3], 1
    %100 = vsyncpa [#allocation6], 1
    %101 = vsyncpa [#allocation4], 1

</llo_original>
